<compile_context>
chip_gen: v5e
topology: v5e:2x2
jax: 0.10.0
libtpu: 0.0.40
codegen_flags: <defaults>
</compile_context>

<pallas_src>
import jax
import jax.numpy as jnp
from jax.experimental import pallas as pl
from jax.experimental.pallas import tpu as pltpu


# ----------------------------------------------------------------------------
# Kernel
# ----------------------------------------------------------------------------
def _ffn_kernel(x_ref, w1_ref, b1_ref, w2_ref, b2_ref, o_ref):
    """out = gelu(x @ W1 + b1) @ W2 + b2, f32 accumulation, bf16 MXU operands."""
    x = x_ref[...]                                                # (tm, D) f32
    h = jnp.dot(x.astype(w1_ref.dtype), w1_ref[...],
                preferred_element_type=jnp.float32)               # (tm, H) f32 acc
    h = h + b1_ref[...]                                           # bias in f32
    # TODO(synk): PyTorch nn.GELU() defaults to the exact erf formulation; the
    # tanh approximation is used here for portable Mosaic lowering (EUP tanh).
    h = jax.nn.gelu(h, approximate=True)
    y = jnp.dot(h.astype(w2_ref.dtype), w2_ref[...],
                preferred_element_type=jnp.float32)               # (tm, D) f32 acc
    y = y + b2_ref[...]
    # Dropout p=0.0 -> identity; nothing to do.
    o_ref[...] = y.astype(o_ref.dtype)


# ----------------------------------------------------------------------------
# Tile selection
# ----------------------------------------------------------------------------
def _round_up(x, m):
    return ((x + m - 1) // m) * m


def _round_down(x, m):
    return (x // m) * m


def _choose_tm(M, D, H, x_itemsize=4, w_itemsize=2):
    """Largest row tile (multiple of 8, capped at 512) that fits a conservative
    scoped-VMEM budget and still leaves >= 2 grid steps when M allows it."""
    budget = 12 * 1024 * 1024  # safe under default scoped VMEM on v5e/v6e/v7x
    # Resident weights/biases (worst case: pipeline double-buffers them too).
    weight_bytes = 2 * (D * H + H * D) * w_itemsize + 2 * (H + D) * 4
    avail = max(budget - weight_bytes, 1 << 20)
    # Per row: double-buffered x tile + out tile (f32) + f32 hidden activation.
    per_row = 2 * 2 * D * x_itemsize + H * 4
    cap = max(8, _round_down(avail // per_row, 8))
    tm = min(512, cap)
    if M > 8:
        # Guarantee at least two grid steps -> pipeline overlap + megacore.
        tm = min(tm, max(8, _round_down(M // 2, 8)))
    tm = min(tm, _round_up(M, 8))
    return max(tm, 8)


# ----------------------------------------------------------------------------
# pallas_call builder + wrapper
# ----------------------------------------------------------------------------
def _build_call(Mp, D, H, tm, out_dtype, single_buffer_weights):
    if single_buffer_weights:
        w_kwargs = dict(pipeline_mode=pl.Buffered(1))  # constant index_map
    else:
        w_kwargs = {}
    grid_spec = pltpu.PrefetchScalarGridSpec(
        num_scalar_prefetch=0,
        grid=(Mp // tm,),
        in_specs=[
            pl.BlockSpec((tm, D), lambda i: (i, 0)),                # x tile
            pl.BlockSpec((D, H), lambda i: (0, 0), **w_kwargs),     # W1 (resident)
            pl.BlockSpec((1, H), lambda i: (0, 0), **w_kwargs),     # b1 (resident)
            pl.BlockSpec((H, D), lambda i: (0, 0), **w_kwargs),     # W2 (resident)
            pl.BlockSpec((1, D), lambda i: (0, 0), **w_kwargs),     # b2 (resident)
        ],
        out_specs=pl.BlockSpec((tm, D), lambda i: (i, 0)),          # lane-dense out
    )
    return pl.pallas_call(
        _ffn_kernel,
        out_shape=jax.ShapeDtypeStruct((Mp, D), out_dtype),
        grid_spec=grid_spec,
        compiler_params=pltpu.CompilerParams(
            dimension_semantics=("parallel",),
        ),
    )


def feed_forward(x, w1, b1, w2, b2, *, tm=None, compute_dtype=jnp.bfloat16):
    """FeedForward(dim, hidden_dim) forward pass via one fused Pallas kernel.

    x : (B, N, D) float32
    w1: (D, H)    float32   (already transposed so h = x @ w1)
    b1: (H,)      float32
    w2: (H, D)    float32   (already transposed so y = h @ w2)
    b2: (D,)      float32
    """
    B, N, D = x.shape
    H = w1.shape[1]
    assert w1.shape == (D, H) and w2.shape == (H, D)
    assert b1.shape == (H,) and b2.shape == (D,)

    M = B * N
    if tm is None:
        tm = _choose_tm(M, D, H, x.dtype.itemsize, jnp.dtype(compute_dtype).itemsize)
    Mp = _round_up(M, tm)

    x2d = x.reshape(M, D)
    if Mp != M:
        x2d = jnp.pad(x2d, ((0, Mp - M), (0, 0)))  # ragged tail -> zero pad

    # MXU-native operand dtype for the weights (bf16); biases stay f32.
    w1c = w1.astype(compute_dtype)
    w2c = w2.astype(compute_dtype)
    b1r = b1.reshape(1, H).astype(jnp.float32)
    b2r = b2.reshape(1, D).astype(jnp.float32)
    args = (x2d, w1c, b1r, w2c, b2r)

    try:
        out2d = _build_call(Mp, D, H, tm, x.dtype, True)(*args)
    except Exception:
        # pipeline_mode=Buffered(1) unsupported on this JAX build; fall back.
        out2d = _build_call(Mp, D, H, tm, x.dtype, False)(*args)

    return out2d[:M].reshape(B, N, D)


# ----------------------------------------------------------------------------
# Pure-JAX reference
# ----------------------------------------------------------------------------
def reference(x, w1, b1, w2, b2):
    h = jax.nn.gelu(jnp.einsum("bnd,dh->bnh", x, w1) + b1, approximate=True)
    return jnp.einsum("bnh,hd->bnd", h, w2) + b2


if __name__ == "__main__":
    # Small shapes consistent with a BIT transformer block.
    B, N, DIM, HIDDEN = 2, 8, 128, 256

    key = jax.random.PRNGKey(0)
    kx, kw1, kb1, kw2, kb2 = jax.random.split(key, 5)

    x = jax.random.normal(kx, (B, N, DIM), dtype=jnp.float32)
    # nn.Linear-like uniform fan-in init.
    bound1 = 1.0 / (DIM ** 0.5)
    w1 = jax.random.uniform(kw1, (DIM, HIDDEN), minval=-bound1, maxval=bound1,
                            dtype=jnp.float32)
    b1 = jax.random.uniform(kb1, (HIDDEN,), minval=-bound1, maxval=bound1,
                            dtype=jnp.float32)
    bound2 = 1.0 / (HIDDEN ** 0.5)
    w2 = jax.random.uniform(kw2, (HIDDEN, DIM), minval=-bound2, maxval=bound2,
                            dtype=jnp.float32)
    b2 = jax.random.uniform(kb2, (DIM,), minval=-bound2, maxval=bound2,
                            dtype=jnp.float32)

    out = feed_forward(x, w1, b1, w2, b2)
    out = jax.block_until_ready(out)

    ref = reference(x, w1, b1, w2, b2)
    assert out.shape == (B, N, DIM)
    # Tolerance accounts for bf16 MXU operands (accumulation stays f32).
    assert jnp.allclose(out, ref, atol=2e-2, rtol=2e-2), (
        f"mismatch vs reference: max abs diff {jnp.max(jnp.abs(out - ref))}"
    )

    print("KERNEL_OK")
</pallas_src>

<mosaic_0001>
module attributes {stable_mosaic.version = 11 : i64} {
  func.func @_ffn_kernel(%arg0: i32, %arg1: memref<8x128xf32, #tpu.memory_space<vmem>>, %arg2: memref<128x256xbf16, #tpu.memory_space<vmem>>, %arg3: memref<1x256xf32, #tpu.memory_space<vmem>>, %arg4: memref<256x128xbf16, #tpu.memory_space<vmem>>, %arg5: memref<1x128xf32, #tpu.memory_space<vmem>>, %arg6: memref<8x128xf32, #tpu.memory_space<vmem>>) attributes {dimension_semantics = [#tpu.dimension_semantics<parallel>], iteration_bounds = array<i64: 2>, scalar_prefetch = 0 : i64, scratch_operands = 0 : i64, tpu.core_type = #tpu.core_type<tc>, window_params = [{transform_indices = @transform_0, window_bounds = array<i64: 8, 128>}, {pipeline_mode = #tpu.pipeline_mode<synchronous>, transform_indices = @transform_1, window_bounds = array<i64: 128, 256>}, {pipeline_mode = #tpu.pipeline_mode<synchronous>, transform_indices = @transform_2, window_bounds = array<i64: 1, 256>}, {pipeline_mode = #tpu.pipeline_mode<synchronous>, transform_indices = @transform_3, window_bounds = array<i64: 256, 128>}, {pipeline_mode = #tpu.pipeline_mode<synchronous>, transform_indices = @transform_4, window_bounds = array<i64: 1, 128>}, {transform_indices = @transform_5, window_bounds = array<i64: 8, 128>}]} {
    %c0 = arith.constant 0 : index
    %c0_0 = arith.constant 0 : index
    %0 = vector.load %arg1[%c0, %c0_0] : memref<8x128xf32, #tpu.memory_space<vmem>>, vector<8x128xf32>
    %1 = arith.truncf %0 : vector<8x128xf32> to vector<8x128xbf16>
    %c0_1 = arith.constant 0 : index
    %c0_2 = arith.constant 0 : index
    %2 = vector.load %arg2[%c0_1, %c0_2] : memref<128x256xbf16, #tpu.memory_space<vmem>>, vector<128x256xbf16>
    %cst = arith.constant dense<0.000000e+00> : vector<8x256xf32>
    %3 = tpu.matmul %1, %2, %cst {dimension_numbers = #tpu.dot_dimension_numbers<[1], [0], [0], [1], [0, 0, 1, 1], [], []>} : vector<8x128xbf16>, vector<128x256xbf16>, vector<8x256xf32> -> vector<8x256xf32>
    %c0_3 = arith.constant 0 : index
    %c0_4 = arith.constant 0 : index
    %4 = vector.load %arg3[%c0_3, %c0_4] : memref<1x256xf32, #tpu.memory_space<vmem>>, vector<1x256xf32>
    %5 = vector.broadcast %4 : vector<1x256xf32> to vector<8x256xf32>
    %6 = arith.addf %3, %5 : vector<8x256xf32>
    %7 = arith.mulf %6, %6 : vector<8x256xf32>
    %8 = arith.mulf %6, %7 : vector<8x256xf32>
    %cst_5 = arith.constant 4.471500e-02 : f32
    %9 = vector.broadcast %cst_5 : f32 to vector<8x256xf32>
    %10 = arith.mulf %9, %8 : vector<8x256xf32>
    %11 = arith.addf %6, %10 : vector<8x256xf32>
    %cst_6 = arith.constant 0.797884583 : f32
    %12 = vector.broadcast %cst_6 : f32 to vector<8x256xf32>
    %13 = arith.mulf %12, %11 : vector<8x256xf32>
    %14 = math.tanh %13 : vector<8x256xf32>
    %cst_7 = arith.constant 1.000000e+00 : f32
    %15 = vector.broadcast %cst_7 : f32 to vector<8x256xf32>
    %16 = arith.addf %15, %14 : vector<8x256xf32>
    %cst_8 = arith.constant 5.000000e-01 : f32
    %17 = vector.broadcast %cst_8 : f32 to vector<8x256xf32>
    %18 = arith.mulf %17, %16 : vector<8x256xf32>
    %19 = arith.mulf %6, %18 : vector<8x256xf32>
    %20 = arith.truncf %19 : vector<8x256xf32> to vector<8x256xbf16>
    %c0_9 = arith.constant 0 : index
    %c0_10 = arith.constant 0 : index
    %21 = vector.load %arg4[%c0_9, %c0_10] : memref<256x128xbf16, #tpu.memory_space<vmem>>, vector<256x128xbf16>
    %cst_11 = arith.constant dense<0.000000e+00> : vector<8x128xf32>
    %22 = tpu.matmul %20, %21, %cst_11 {dimension_numbers = #tpu.dot_dimension_numbers<[1], [0], [0], [1], [0, 0, 1, 1], [], []>} : vector<8x256xbf16>, vector<256x128xbf16>, vector<8x128xf32> -> vector<8x128xf32>
    %c0_12 = arith.constant 0 : index
    %c0_13 = arith.constant 0 : index
    %23 = vector.load %arg5[%c0_12, %c0_13] : memref<1x128xf32, #tpu.memory_space<vmem>>, vector<1x128xf32>
    %24 = vector.broadcast %23 : vector<1x128xf32> to vector<8x128xf32>
    %25 = arith.addf %22, %24 : vector<8x128xf32>
    %c0_14 = arith.constant 0 : index
    %c0_15 = arith.constant 0 : index
    %26 = vector.load %arg6[%c0_14, %c0_15] : memref<8x128xf32, #tpu.memory_space<vmem>>, vector<8x128xf32>
    tpu.vector_store %arg6[%c0_14, %c0_15], %25 {strides = array<i32>} : memref<8x128xf32, #tpu.memory_space<vmem>>, vector<8x128xf32>,
    return
  }
  func.func @transform_0(%arg0: i32) -> (i32, i32) {
    %c0_i32 = arith.constant 0 : i32
    %c0_i32_0 = arith.constant 0 : i32
    return %arg0, %c0_i32 : i32, i32
  }
  func.func @transform_1(%arg0: i32) -> (i32, i32) {
    %c0_i32 = arith.constant 0 : i32
    %c0_i32_0 = arith.constant 0 : i32
    %c0_i32_1 = arith.constant 0 : i32
    return %c0_i32, %c0_i32_0 : i32, i32
  }
  func.func @transform_2(%arg0: i32) -> (i32, i32) {
    %c0_i32 = arith.constant 0 : i32
    %c0_i32_0 = arith.constant 0 : i32
    %c0_i32_1 = arith.constant 0 : i32
    return %c0_i32, %c0_i32_0 : i32, i32
  }
  func.func @transform_3(%arg0: i32) -> (i32, i32) {
    %c0_i32 = arith.constant 0 : i32
    %c0_i32_0 = arith.constant 0 : i32
    %c0_i32_1 = arith.constant 0 : i32
    return %c0_i32, %c0_i32_0 : i32, i32
  }
  func.func @transform_4(%arg0: i32) -> (i32, i32) {
    %c0_i32 = arith.constant 0 : i32
    %c0_i32_0 = arith.constant 0 : i32
    %c0_i32_1 = arith.constant 0 : i32
    return %c0_i32, %c0_i32_0 : i32, i32
  }
  func.func @transform_5(%arg0: i32) -> (i32, i32) {
    %c0_i32 = arith.constant 0 : i32
    %c0_i32_0 = arith.constant 0 : i32
    return %arg0, %c0_i32 : i32, i32
  }
}

module attributes {stable_mosaic.version = 11 : i64} {
  func.func @_ffn_kernel(%arg0: i32, %arg1: memref<8x128xf32, #tpu.memory_space<vmem>>, %arg2: memref<128x256xbf16, #tpu.memory_space<vmem>>, %arg3: memref<1x256xf32, #tpu.memory_space<vmem>>, %arg4: memref<256x128xbf16, #tpu.memory_space<vmem>>, %arg5: memref<1x128xf32, #tpu.memory_space<vmem>>, %arg6: memref<8x128xf32, #tpu.memory_space<vmem>>) attributes {dimension_semantics = [#tpu.dimension_semantics<parallel>], iteration_bounds = array<i64: 2>, scalar_prefetch = 0 : i64, scratch_operands = 0 : i64, tpu.core_type = #tpu.core_type<tc>, window_params = [{transform_indices = @transform_0, window_bounds = array<i64: 8, 128>}, {pipeline_mode = #tpu.pipeline_mode<synchronous>, transform_indices = @transform_1, window_bounds = array<i64: 128, 256>}, {pipeline_mode = #tpu.pipeline_mode<synchronous>, transform_indices = @transform_2, window_bounds = array<i64: 1, 256>}, {pipeline_mode = #tpu.pipeline_mode<synchronous>, transform_indices = @transform_3, window_bounds = array<i64: 256, 128>}, {pipeline_mode = #tpu.pipeline_mode<synchronous>, transform_indices = @transform_4, window_bounds = array<i64: 1, 128>}, {transform_indices = @transform_5, window_bounds = array<i64: 8, 128>}]} {
    %c0 = arith.constant 0 : index
    %c0_0 = arith.constant 0 : index
    %0 = vector.load %arg1[%c0, %c0_0] : memref<8x128xf32, #tpu.memory_space<vmem>>, vector<8x128xf32>
    %1 = arith.truncf %0 : vector<8x128xf32> to vector<8x128xbf16>
    %c0_1 = arith.constant 0 : index
    %c0_2 = arith.constant 0 : index
    %2 = vector.load %arg2[%c0_1, %c0_2] : memref<128x256xbf16, #tpu.memory_space<vmem>>, vector<128x256xbf16>
    %cst = arith.constant dense<0.000000e+00> : vector<8x256xf32>
    %3 = tpu.matmul %1, %2, %cst {dimension_numbers = #tpu.dot_dimension_numbers<[1], [0], [0], [1], [0, 0, 1, 1], [], []>} : vector<8x128xbf16>, vector<128x256xbf16>, vector<8x256xf32> -> vector<8x256xf32>
    %c0_3 = arith.constant 0 : index
    %c0_4 = arith.constant 0 : index
    %4 = vector.load %arg3[%c0_3, %c0_4] : memref<1x256xf32, #tpu.memory_space<vmem>>, vector<1x256xf32>
    %5 = vector.broadcast %4 : vector<1x256xf32> to vector<8x256xf32>
    %6 = arith.addf %3, %5 : vector<8x256xf32>
    %7 = arith.mulf %6, %6 : vector<8x256xf32>
    %8 = arith.mulf %6, %7 : vector<8x256xf32>
    %cst_5 = arith.constant 4.471500e-02 : f32
    %9 = vector.broadcast %cst_5 : f32 to vector<8x256xf32>
    %10 = arith.mulf %9, %8 : vector<8x256xf32>
    %11 = arith.addf %6, %10 : vector<8x256xf32>
    %cst_6 = arith.constant 0.797884583 : f32
    %12 = vector.broadcast %cst_6 : f32 to vector<8x256xf32>
    %13 = arith.mulf %12, %11 : vector<8x256xf32>
    %14 = math.tanh %13 : vector<8x256xf32>
    %cst_7 = arith.constant 1.000000e+00 : f32
    %15 = vector.broadcast %cst_7 : f32 to vector<8x256xf32>
    %16 = arith.addf %15, %14 : vector<8x256xf32>
    %cst_8 = arith.constant 5.000000e-01 : f32
    %17 = vector.broadcast %cst_8 : f32 to vector<8x256xf32>
    %18 = arith.mulf %17, %16 : vector<8x256xf32>
    %19 = arith.mulf %6, %18 : vector<8x256xf32>
    %20 = arith.truncf %19 : vector<8x256xf32> to vector<8x256xbf16>
    %c0_9 = arith.constant 0 : index
    %c0_10 = arith.constant 0 : index
    %21 = vector.load %arg4[%c0_9, %c0_10] : memref<256x128xbf16, #tpu.memory_space<vmem>>, vector<256x128xbf16>
    %cst_11 = arith.constant dense<0.000000e+00> : vector<8x128xf32>
    %22 = tpu.matmul %20, %21, %cst_11 {dimension_numbers = #tpu.dot_dimension_numbers<[1], [0], [0], [1], [0, 0, 1, 1], [], []>} : vector<8x256xbf16>, vector<256x128xbf16>, vector<8x128xf32> -> vector<8x128xf32>
    %c0_12 = arith.constant 0 : index
    %c0_13 = arith.constant 0 : index
    %23 = vector.load %arg5[%c0_12, %c0_13] : memref<1x128xf32, #tpu.memory_space<vmem>>, vector<1x128xf32>
    %24 = vector.broadcast %23 : vector<1x128xf32> to vector<8x128xf32>
    %25 = arith.addf %22, %24 : vector<8x128xf32>
    %c0_14 = arith.constant 0 : index
    %c0_15 = arith.constant 0 : index
    %26 = vector.load %arg6[%c0_14, %c0_15] : memref<8x128xf32, #tpu.memory_space<vmem>>, vector<8x128xf32>
    tpu.vector_store %arg6[%c0_14, %c0_15], %25 {strides = array<i32>} : memref<8x128xf32, #tpu.memory_space<vmem>>, vector<8x128xf32>,
    return
  }
  func.func @transform_0(%arg0: i32) -> (i32, i32) {
    %c0_i32 = arith.constant 0 : i32
    %c0_i32_0 = arith.constant 0 : i32
    return %arg0, %c0_i32 : i32, i32
  }
  func.func @transform_1(%arg0: i32) -> (i32, i32) {
    %c0_i32 = arith.constant 0 : i32
    %c0_i32_0 = arith.constant 0 : i32
    %c0_i32_1 = arith.constant 0 : i32
    return %c0_i32, %c0_i32_0 : i32, i32
  }
  func.func @transform_2(%arg0: i32) -> (i32, i32) {
    %c0_i32 = arith.constant 0 : i32
    %c0_i32_0 = arith.constant 0 : i32
    %c0_i32_1 = arith.constant 0 : i32
    return %c0_i32, %c0_i32_0 : i32, i32
  }
  func.func @transform_3(%arg0: i32) -> (i32, i32) {
    %c0_i32 = arith.constant 0 : i32
    %c0_i32_0 = arith.constant 0 : i32
    %c0_i32_1 = arith.constant 0 : i32
    return %c0_i32, %c0_i32_0 : i32, i32
  }
  func.func @transform_4(%arg0: i32) -> (i32, i32) {
    %c0_i32 = arith.constant 0 : i32
    %c0_i32_0 = arith.constant 0 : i32
    %c0_i32_1 = arith.constant 0 : i32
    return %c0_i32, %c0_i32_0 : i32, i32
  }
  func.func @transform_5(%arg0: i32) -> (i32, i32) {
    %c0_i32 = arith.constant 0 : i32
    %c0_i32_0 = arith.constant 0 : i32
    return %arg0, %c0_i32 : i32, i32
  }
}

</mosaic_0001>

<llo_original>
// kernel: tpu_custom_call.1
$region0: #{tpu_custom_call.1}
  #allocation0 [shape = 'u32[]', space=smem, size = 0x4, offset = 0x4, fixed_abs, tag = 'smem constant byte address 0x4 - core index']
  #allocation1 [shape = 'u32[72,128]{1,0:T(1,128)}', space=vmem, size = 0x9000, scoped, tag = 'internal scratch']
  %s0 = inlined_call_operand.hbm [shape: f32[16,128], index: 0, kind: input, shape index: {}]
  %s1 = inlined_call_operand.hbm [shape: bf16[128,256], index: 1, kind: input, shape index: {}]
  %s2 = inlined_call_operand.hbm [shape: f32[1,256], index: 2, kind: input, shape index: {}]
  %s3 = inlined_call_operand.hbm [shape: bf16[256,128], index: 3, kind: input, shape index: {}]
  %s4 = inlined_call_operand.vmem [shape: f32[1,128], index: 4, kind: input, shape index: {}]
  %s5 = inlined_call_operand.hbm [shape: f32[16,128], index: 5, kind: output, shape index: {}]
  %s6 = sld [smem:[#allocation0]]
  $region69: #{tpu_custom_call.1} parent=0
    _
  %s8 = ssub.s32 1, %s6
  %s9 = scalar_select 0, %s8, %s6
  $region1: #{tpu_custom_call.1} parent=0
    #allocation2 [shape = 'u8[8192]{0}', space=vmem, size = 0x2000, scoped, tag = 'input window, operand 0']
    #allocation3 [shape = 's32[2]{0}', space=sflag, size = 0x8, scoped, tag = 'scoped memory for tpu_custom_call.1']
    #allocation4 [shape = 's32[2]{0}', space=sflag, size = 0x8, scoped, tag = 'scoped memory for tpu_custom_call.1']
    #allocation5 [shape = 'u8[65536]{0}', space=vmem, size = 0x10000, scoped, tag = 'input window, operand 1, single buffered']
    #allocation6 [shape = 's32[1]{0}', space=sflag, size = 0x4, scoped, tag = 'scoped memory for tpu_custom_call.1']
    #allocation7 [shape = 'u8[1024]{0}', space=vmem, size = 0x400, scoped, tag = 'input window, operand 2, single buffered']
    #allocation8 [shape = 'u8[65536]{0}', space=vmem, size = 0x10000, scoped, tag = 'input window, operand 3, single buffered']
    #allocation9 [shape = 's32[1]{0}', space=sflag, size = 0x4, scoped, tag = 'scoped memory for tpu_custom_call.1']
    #allocation10 [shape = 'u8[8192]{0}', space=vmem, size = 0x2000, scoped, tag = 'output window, operand 0']
    %10 = vsyncpa [#allocation3], 0
    %s11 = scalar_lea.sflag [#allocation3], 1
    %12 = vsyncpa %s11, 0
    %13 = vsyncpa [#allocation6], 0
    %14 = vsyncpa [#allocation9], 0
    %15 = vsyncpa [#allocation4], 0
    %s16 = scalar_lea.sflag [#allocation4], 1
    %17 = vsyncpa %s16, 0
    loop: start=0, step=1, limit=4
    $region2: #{tpu_custom_call.1} parent=1 // loop_pre_header
      _
    $region3: #{tpu_custom_call.1} parent=1 // loop_header
      %s19 = sphi 0, %s23
      %p20 = scmp.ge.s32.totalorder %s19, 4
      %s29 = sphi 0, %s31
      %s32 = sphi 0, %s29
      %s33 = sphi 0, %s32
      %s49 = sphi 0, %s33
      %s53 = sphi 0, %s53
      %s55 = sphi 0, %s53
      %s56 = sphi 0, %s55
      %s70 = sphi 0, %s56
      %s74 = sphi 0, %s74
      %s76 = sphi 0, %s74
      %s77 = sphi 0, %s76
      %s91 = sphi 0, %s77
      %s95 = sphi 0, %s95
      %s97 = sphi 0, %s95
      %s98 = sphi 0, %s97
      %s112 = sphi 0, %s98
      %s116 = sphi 0, %s116
      %s118 = sphi 0, %s116
      %s119 = sphi 0, %s118
      %s133 = sphi 0, %s119
      %s139 = sphi 0, %s141
      %s142 = sphi 0, %s139
      %s143 = sphi 0, %s142
      %s159 = sphi 0, %s143
    $region4: #{tpu_custom_call.1} parent=1 // loop_header_branch
      %22 = sbr.rel (%p20) target = $region8
    $region5: #{tpu_custom_call.1} parent=1 // loop_body
      %s24 = ssub.s32 %s19, 1
      %s25 = ssub.s32 %s19, 2
      %s26 = sadd.s32 %s19, 1
      %s27 = ssub.s32 %s19, %s26
      %p28 = scmp.eq.s32.totalorder %s27, 0
      %s30 = sadd.s32 %s29, 1
      %s31 = scalar_select %p28, %s29, %s30
      %p34 = pneg %p28
      %p35 = scmp.eq.s32.totalorder %s19, 1
      %p36 = por %p34, %p35
      %p37 = scmp.ne.s32.totalorder %s29, %s32
      %p38 = scmp.eq.s32.totalorder %s19, 0
      %p39 = por %p37, %p38
      %p40 = scmp.ne.s32.totalorder %s29, %s32
      %p41 = scmp.eq.s32.totalorder %s24, 1
      %p42 = por %p40, %p41
      %p43 = scmp.ne.s32.totalorder %s32, %s33
      %p44 = scmp.eq.s32.totalorder %s24, 0
      %p45 = por %p43, %p44
      %p46 = scmp.ne.s32.totalorder %s32, %s33
      %p47 = scmp.eq.s32.totalorder %s25, 1
      %p48 = por %p46, %p47
      %p50 = scmp.ne.s32.totalorder %s33, %s49
      %p51 = scmp.eq.s32.totalorder %s25, 0
      %p52 = por %p50, %p51
      %s54 = sadd.s32 %s53, 1
      %p57 = scmp.eq.s32.totalorder %s19, 1
      %p58 = scmp.ne.s32.totalorder %s53, %s55
      %p59 = scmp.eq.s32.totalorder %s19, 0
      %p60 = por %p58, %p59
      %p61 = scmp.ne.s32.totalorder %s53, %s55
      %p62 = scmp.eq.s32.totalorder %s24, 1
      %p63 = por %p61, %p62
      %p64 = scmp.ne.s32.totalorder %s55, %s56
      %p65 = scmp.eq.s32.totalorder %s24, 0
      %p66 = por %p64, %p65
      %p67 = scmp.ne.s32.totalorder %s55, %s56
      %p68 = scmp.eq.s32.totalorder %s25, 1
      %p69 = por %p67, %p68
      %p71 = scmp.ne.s32.totalorder %s56, %s70
      %p72 = scmp.eq.s32.totalorder %s25, 0
      %p73 = por %p71, %p72
      %s75 = sadd.s32 %s74, 1
      %p78 = scmp.eq.s32.totalorder %s19, 1
      %p79 = scmp.ne.s32.totalorder %s74, %s76
      %p80 = scmp.eq.s32.totalorder %s19, 0
      %p81 = por %p79, %p80
      %p82 = scmp.ne.s32.totalorder %s74, %s76
      %p83 = scmp.eq.s32.totalorder %s24, 1
      %p84 = por %p82, %p83
      %p85 = scmp.ne.s32.totalorder %s76, %s77
      %p86 = scmp.eq.s32.totalorder %s24, 0
      %p87 = por %p85, %p86
      %p88 = scmp.ne.s32.totalorder %s76, %s77
      %p89 = scmp.eq.s32.totalorder %s25, 1
      %p90 = por %p88, %p89
      %p92 = scmp.ne.s32.totalorder %s77, %s91
      %p93 = scmp.eq.s32.totalorder %s25, 0
      %p94 = por %p92, %p93
      %s96 = sadd.s32 %s95, 1
      %p99 = scmp.eq.s32.totalorder %s19, 1
      %p100 = scmp.ne.s32.totalorder %s95, %s97
      %p101 = scmp.eq.s32.totalorder %s19, 0
      %p102 = por %p100, %p101
      %p103 = scmp.ne.s32.totalorder %s95, %s97
      %p104 = scmp.eq.s32.totalorder %s24, 1
      %p105 = por %p103, %p104
      %p106 = scmp.ne.s32.totalorder %s97, %s98
      %p107 = scmp.eq.s32.totalorder %s24, 0
      %p108 = por %p106, %p107
      %p109 = scmp.ne.s32.totalorder %s97, %s98
      %p110 = scmp.eq.s32.totalorder %s25, 1
      %p111 = por %p109, %p110
      %p113 = scmp.ne.s32.totalorder %s98, %s112
      %p114 = scmp.eq.s32.totalorder %s25, 0
      %p115 = por %p113, %p114
      %s117 = sadd.s32 %s116, 1
      %p120 = scmp.eq.s32.totalorder %s19, 1
      %p121 = scmp.ne.s32.totalorder %s116, %s118
      %p122 = scmp.eq.s32.totalorder %s19, 0
      %p123 = por %p121, %p122
      %p124 = scmp.ne.s32.totalorder %s116, %s118
      %p125 = scmp.eq.s32.totalorder %s24, 1
      %p126 = por %p124, %p125
      %p127 = scmp.ne.s32.totalorder %s118, %s119
      %p128 = scmp.eq.s32.totalorder %s24, 0
      %p129 = por %p127, %p128
      %p130 = scmp.ne.s32.totalorder %s118, %s119
      %p131 = scmp.eq.s32.totalorder %s25, 1
      %p132 = por %p130, %p131
      %p134 = scmp.ne.s32.totalorder %s119, %s133
      %p135 = scmp.eq.s32.totalorder %s25, 0
      %p136 = por %p134, %p135
      %s137 = ssub.s32 %s19, %s26
      %p138 = scmp.eq.s32.totalorder %s137, 0
      %s140 = sadd.s32 %s139, 1
      %s141 = scalar_select %p138, %s139, %s140
      %p144 = pneg %p138
      %p145 = scmp.eq.s32.totalorder %s19, 1
      %p146 = por %p144, %p145
      %p147 = scmp.ne.s32.totalorder %s139, %s142
      %p148 = scmp.eq.s32.totalorder %s19, 0
      %p149 = por %p147, %p148
      %p150 = scmp.ne.s32.totalorder %s139, %s142
      %p151 = scmp.eq.s32.totalorder %s24, 1
      %p152 = por %p150, %p151
      %p153 = scmp.ne.s32.totalorder %s142, %s143
      %p154 = scmp.eq.s32.totalorder %s24, 0
      %p155 = por %p153, %p154
      %p156 = scmp.ne.s32.totalorder %s142, %s143
      %p157 = scmp.eq.s32.totalorder %s25, 1
      %p158 = por %p156, %p157
      %p160 = scmp.ne.s32.totalorder %s143, %s159
      %p161 = scmp.eq.s32.totalorder %s25, 0
      %p162 = por %p160, %p161
      %p163 = scmp.le.s32.totalorder 1, %s19
      %p164 = scmp.lt.s32.totalorder %s19, 3
      %p165 = pnand %p163, %p164
      %p166 = pneg %p165
      // Predicated region
      $region9: #{tpu_custom_call.1} parent=5 // pred_check
        _
      $region10: #{tpu_custom_call.1} parent=5 // pred_check_branch
        %168 = sbr.rel (%p165) target = $region12
      $region11: #{tpu_custom_call.1} parent=5 // pred_region
        %s169 = ssub.s32 %s19, 1
        // Predicated region
        $region13: #{tpu_custom_call.1} parent=11 // pred_check
          %p170 = pneg %p66
        $region14: #{tpu_custom_call.1} parent=11 // pred_check_branch
          %172 = sbr.rel (%p170) target = $region16
        $region15: #{tpu_custom_call.1} parent=11 // pred_region
          %174 = vsyncadd [#allocation6], 0
          %s175 = sshll.u32 %s1, 4
          %s176 = int_to_ptr.hbm [resolvable:$true] %s175
          %s177 = sshll.u32 [#allocation5], 4
          %s178 = int_to_ptr.vmem [resolvable:$true] %s177
          %183 = dma.hbm_to_vmem [thread:$0]  %s176, 2048, %s178, [#allocation6], 128, 128, 8
        $region16: #{tpu_custom_call.1} parent=11 // pred_fallthru
          _
        // Predicated region
        $region17: #{tpu_custom_call.1} parent=11 // pred_check
          %p184 = pneg %p87
        $region18: #{tpu_custom_call.1} parent=11 // pred_check_branch
          %186 = sbr.rel (%p184) target = $region20
        $region19: #{tpu_custom_call.1} parent=11 // pred_region
          %188 = vsyncadd [#allocation6], 0
          %s190 = sshll.u32 %s2, 4
          %s191 = int_to_ptr.hbm [resolvable:$true] %s190
          %s192 = sshll.u32 [#allocation7], 4
          %s193 = int_to_ptr.vmem [resolvable:$true] %s192
          %195 = dma.hbm_to_vmem [thread:$0]  %s191, 32, %s193, [#allocation6]
        $region20: #{tpu_custom_call.1} parent=11 // pred_fallthru
          _
        // Predicated region
        $region21: #{tpu_custom_call.1} parent=11 // pred_check
          %p196 = pneg %p108
        $region22: #{tpu_custom_call.1} parent=11 // pred_check_branch
          %198 = sbr.rel (%p196) target = $region24
        $region23: #{tpu_custom_call.1} parent=11 // pred_region
          %200 = vsyncadd [#allocation9], 0
          %s201 = sshll.u32 %s3, 4
          %s202 = int_to_ptr.hbm [resolvable:$true] %s201
          %s203 = sshll.u32 [#allocation8], 4
          %s204 = int_to_ptr.vmem [resolvable:$true] %s203
          %209 = dma.hbm_to_vmem [thread:$0]  %s202, 2048, %s204, [#allocation9], 64, 64, 4
        $region24: #{tpu_custom_call.1} parent=11 // pred_fallthru
          _
        // Predicated region
        $region25: #{tpu_custom_call.1} parent=11 // pred_check
          %p210 = pneg %p129
        $region26: #{tpu_custom_call.1} parent=11 // pred_check_branch
          %212 = sbr.rel (%p210) target = $region28
        $region27: #{tpu_custom_call.1} parent=11 // pred_region
          _
        $region28: #{tpu_custom_call.1} parent=11 // pred_fallthru
          _
      $region12: #{tpu_custom_call.1} parent=5 // pred_fallthru
        _
      %p213 = scmp.lt.s32.totalorder %s19, 2
      // Predicated region
      $region29: #{tpu_custom_call.1} parent=5 // pred_check
        %p214 = pneg %p213
      $region30: #{tpu_custom_call.1} parent=5 // pred_check_branch
        %216 = sbr.rel (%p214) target = $region32
      $region31: #{tpu_custom_call.1} parent=5 // pred_region
        // Predicated region
        $region33: #{tpu_custom_call.1} parent=31 // pred_check
          %p217 = pneg %p39
        $region34: #{tpu_custom_call.1} parent=31 // pred_check_branch
          %219 = sbr.rel (%p217) target = $region36
        $region35: #{tpu_custom_call.1} parent=31 // pred_region
          %s220 = sand.u32 %s29, 1
          %s221 = scalar_lea.sflag [#allocation3], %s220
          %s222 = sand.u32 %s29, 1
          %s223 = smul.addr %s222, 8
          %s224 = scalar_lea.vmem [#allocation2], %s223
          %226 = vsyncadd %s221, 0
          %s227 = smul.addr %s19, 8
          %s228 = scalar_lea.hbm %s0, %s227
          %s230 = sshll.u32 %s228, 4
          %s231 = int_to_ptr.hbm [resolvable:$true] %s230
          %s232 = sshll.u32 %s224, 4
          %s233 = int_to_ptr.vmem [resolvable:$true] %s232
          %235 = dma.hbm_to_vmem [thread:$0]  %s231, 128, %s233, %s221
        $region36: #{tpu_custom_call.1} parent=31 // pred_fallthru
          _
      $region32: #{tpu_custom_call.1} parent=5 // pred_fallthru
        _
      %p236 = scmp.le.s32.totalorder 1, %s19
      %p237 = scmp.lt.s32.totalorder %s19, 3
      %p238 = pnand %p236, %p237
      %p239 = pneg %p238
      // Predicated region
      $region37: #{tpu_custom_call.1} parent=5 // pred_check
        _
      $region38: #{tpu_custom_call.1} parent=5 // pred_check_branch
        %241 = sbr.rel (%p238) target = $region40
      $region39: #{tpu_custom_call.1} parent=5 // pred_region
        %s242 = ssub.s32 %s19, 1
        %s243 = sand.u32 %s32, 1
        %s244 = scalar_lea.sflag [#allocation3], %s243
        %s245 = sand.u32 %s32, 1
        %s246 = smul.addr %s245, 8
        %s247 = scalar_lea.vmem [#allocation2], %s246
        // Predicated region
        $region41: #{tpu_custom_call.1} parent=39 // pred_check
          %p248 = pneg %p45
        $region42: #{tpu_custom_call.1} parent=39 // pred_check_branch
          %250 = sbr.rel (%p248) target = $region44
        $region43: #{tpu_custom_call.1} parent=39 // pred_region
          %252 = dma.done %s244, 128
        $region44: #{tpu_custom_call.1} parent=39 // pred_fallthru
          _
        // Predicated region
        $region45: #{tpu_custom_call.1} parent=39 // pred_check
          %p253 = pneg %p66
        $region46: #{tpu_custom_call.1} parent=39 // pred_check_branch
          %255 = sbr.rel (%p253) target = $region48
        $region47: #{tpu_custom_call.1} parent=39 // pred_region
          %257 = dma.done [#allocation6], 2048
        $region48: #{tpu_custom_call.1} parent=39 // pred_fallthru
          _
        // Predicated region
        $region49: #{tpu_custom_call.1} parent=39 // pred_check
          %p258 = pneg %p87
        $region50: #{tpu_custom_call.1} parent=39 // pred_check_branch
          %260 = sbr.rel (%p258) target = $region52
        $region51: #{tpu_custom_call.1} parent=39 // pred_region
          %262 = dma.done [#allocation6], 32
        $region52: #{tpu_custom_call.1} parent=39 // pred_fallthru
          _
        // Predicated region
        $region53: #{tpu_custom_call.1} parent=39 // pred_check
          %p263 = pneg %p108
        $region54: #{tpu_custom_call.1} parent=39 // pred_check_branch
          %265 = sbr.rel (%p263) target = $region56
        $region55: #{tpu_custom_call.1} parent=39 // pred_region
          %267 = dma.done [#allocation9], 2048
        $region56: #{tpu_custom_call.1} parent=39 // pred_fallthru
          _
        %s268 = sand.u32 %s32, 1
        %s269 = scalar_lea.sflag [#allocation3], %s268
        %s270 = sand.u32 %s32, 1
        %s271 = smul.addr %s270, 8
        %s272 = scalar_lea.vmem [#allocation2], %s271
        %p273 = pneg %p45
        %p274 = pneg %p42
        %p275 = pneg %p66
        %p276 = pneg %p63
        %p277 = pneg %p87
        %p278 = pneg %p84
        %p279 = pneg %p108
        %p280 = pneg %p105
        %p281 = pneg %p129
        %p282 = pneg %p126
        %p283 = pneg %p155
        %p284 = pneg %p152
        %s285 = sand.u32 %s142, 1
        %s286 = scalar_lea.sflag [#allocation4], %s285
        %s287 = sand.u32 %s142, 1
        %s288 = smul.addr %s287, 8
        %s289 = scalar_lea.vmem [#allocation10], %s288
        %v290 = vld [vmem:[%s247] sm:$0xff]
        %v291 = vpack.c.bf16 %v290, %v290
        %v292 = vld [vmem:[#allocation5] sm:$0xff]
        %v293 = vld [vmem:[#allocation5 + $0x8] sm:$0xff]
        %v294 = vld [vmem:[#allocation5 + $0x10] sm:$0xff]
        %v295 = vld [vmem:[#allocation5 + $0x18] sm:$0xff]
        %v296 = vld [vmem:[#allocation5 + $0x20] sm:$0xff]
        %v297 = vld [vmem:[#allocation5 + $0x28] sm:$0xff]
        %v298 = vld [vmem:[#allocation5 + $0x30] sm:$0xff]
        %v299 = vld [vmem:[#allocation5 + $0x38] sm:$0xff]
        %v300 = vld [vmem:[#allocation5 + $0x40] sm:$0xff]
        %v301 = vld [vmem:[#allocation5 + $0x48] sm:$0xff]
        %v302 = vld [vmem:[#allocation5 + $0x50] sm:$0xff]
        %v303 = vld [vmem:[#allocation5 + $0x58] sm:$0xff]
        %v304 = vld [vmem:[#allocation5 + $0x60] sm:$0xff]
        %v305 = vld [vmem:[#allocation5 + $0x68] sm:$0xff]
        %v306 = vld [vmem:[#allocation5 + $0x70] sm:$0xff]
        %v307 = vld [vmem:[#allocation5 + $0x78] sm:$0xff]
        %v308 = vld [vmem:[#allocation7] sm:$0x3]
        %v310 = vperm.slane %v308, 0
        %v311 = vperm.slane %v308, 1
        %v330 = vunpack.c.l.b16 %v292
        %v331 = vunpack.c.h.b16 %v292
        %v332 = vunpack.c.l.b16 %v293
        %v333 = vunpack.c.h.b16 %v293
        %v334 = vunpack.c.l.b16 %v294
        %v335 = vunpack.c.h.b16 %v294
        %v336 = vunpack.c.l.b16 %v295
        %v337 = vunpack.c.h.b16 %v295
        %v338 = vunpack.c.l.b16 %v296
        %v339 = vunpack.c.h.b16 %v296
        %v340 = vunpack.c.l.b16 %v297
        %v341 = vunpack.c.h.b16 %v297
        %v342 = vunpack.c.l.b16 %v298
        %v343 = vunpack.c.h.b16 %v298
        %v344 = vunpack.c.l.b16 %v299
        %v345 = vunpack.c.h.b16 %v299
        %v346 = vunpack.c.l.b16 %v300
        %v347 = vunpack.c.h.b16 %v300
        %v348 = vunpack.c.l.b16 %v301
        %v349 = vunpack.c.h.b16 %v301
        %v350 = vunpack.c.l.b16 %v302
        %v351 = vunpack.c.h.b16 %v302
        %v352 = vunpack.c.l.b16 %v303
        %v353 = vunpack.c.h.b16 %v303
        %v354 = vunpack.c.l.b16 %v304
        %v355 = vunpack.c.h.b16 %v304
        %v356 = vunpack.c.l.b16 %v305
        %v357 = vunpack.c.h.b16 %v305
        %v358 = vunpack.c.l.b16 %v306
        %v359 = vunpack.c.h.b16 %v306
        %v360 = vunpack.c.l.b16 %v307
        %v361 = vunpack.c.h.b16 %v307
        %v362 = vpack.c.b16 %v332, %v330
        %v363 = vpack.c.b16 %v333, %v331
        %v364 = vpack.c.b16 %v336, %v334
        %v365 = vpack.c.b16 %v337, %v335
        %v366 = vpack.c.b16 %v340, %v338
        %v367 = vpack.c.b16 %v341, %v339
        %v368 = vpack.c.b16 %v344, %v342
        %v369 = vpack.c.b16 %v345, %v343
        %v370 = vpack.c.b16 %v348, %v346
        %v371 = vpack.c.b16 %v349, %v347
        %v372 = vpack.c.b16 %v352, %v350
        %v373 = vpack.c.b16 %v353, %v351
        %v374 = vpack.c.b16 %v356, %v354
        %v375 = vpack.c.b16 %v357, %v355
        %v376 = vpack.c.b16 %v360, %v358
        %v377 = vpack.c.b16 %v361, %v359
        %394 = vmatpush.bf16.msra.mxu0 %v376
        %395 = vmatpush.bf16.msra.mxu0 %v374
        %396 = vmatpush.bf16.msra.mxu0 %v372
        %397 = vmatpush.bf16.msra.mxu0 %v370
        %398 = vmatpush.bf16.msra.mxu0 %v368
        %399 = vmatpush.bf16.msra.mxu0 %v366
        %400 = vmatpush.bf16.msra.mxu0 %v364
        %401 = vmatpush.bf16.msra.mxu0 %v362
        %402 = vmatmul.bf16.gmra.mxu0 %v291
        %v403 = vpop.f32.mrf.mxu0
        %v404 = vadd.f32 %v310, %v403
        %v405 = vpop.f32.mrf.mxu0
        %406 = vdwg.mxu0
        %407 = vmatpush.bf16.msra.mxu0 %v377
        %408 = vmatpush.bf16.msra.mxu0 %v375
        %409 = vmatpush.bf16.msra.mxu0 %v373
        %410 = vmatpush.bf16.msra.mxu0 %v371
        %411 = vmatpush.bf16.msra.mxu0 %v369
        %412 = vmatpush.bf16.msra.mxu0 %v367
        %413 = vmatpush.bf16.msra.mxu0 %v365
        %414 = vmatpush.bf16.msra.mxu0 %v363
        %415 = vmatmul.bf16.gmra.mxu0 %v291
        %v416 = vpop.f32.mrf.mxu0
        %v417 = vadd.f32 %v311, %v416
        %v418 = vpop.f32.mrf.mxu0
        %419 = vdwg.mxu0
        %v420 = vmul.f32 %v404, %v404
        %v421 = vmul.f32 %v417, %v417
        %v422 = vmul.f32 %v404, %v420
        %v423 = vmul.f32 %v417, %v421
        %v424 = vmul.f32 %v422, 0.044715
        %v425 = vmul.f32 %v423, 0.044715
        %v426 = vadd.f32 %v404, %v424
        %v427 = vadd.f32 %v417, %v425
        %v428 = vmul.f32 %v426, 0.7978846
        %v429 = vmul.f32 %v427, 0.7978846
        %v430 = vtanh.pop %v428
        %v431 = vtanh.pop %v429
        %v432 = vadd.f32 %v430, 1.0
        %v433 = vadd.f32 %v431, 1.0
        %v434 = vmul.f32 %v432, 0.5
        %v435 = vmul.f32 %v433, 0.5
        %v436 = vmul.f32 %v404, %v434
        %v437 = vmul.f32 %v417, %v435
        %v438 = vpack.c.bf16 %v436, %v436
        %v439 = vpack.c.bf16 %v437, %v437
        %v440 = vld [vmem:[#allocation8] sm:$0xf]
        %v441 = vld [vmem:[#allocation8 + $0x4] sm:$0xf]
        %v442 = vld [vmem:[#allocation8 + $0x8] sm:$0xf]
        %v443 = vld [vmem:[#allocation8 + $0xc] sm:$0xf]
        %v444 = vld [vmem:[#allocation8 + $0x10] sm:$0xf]
        %v445 = vld [vmem:[#allocation8 + $0x14] sm:$0xf]
        %v446 = vld [vmem:[#allocation8 + $0x18] sm:$0xf]
        %v447 = vld [vmem:[#allocation8 + $0x1c] sm:$0xf]
        %v448 = vld [vmem:[#allocation8 + $0x20] sm:$0xf]
        %v449 = vld [vmem:[#allocation8 + $0x24] sm:$0xf]
        %v450 = vld [vmem:[#allocation8 + $0x28] sm:$0xf]
        %v451 = vld [vmem:[#allocation8 + $0x2c] sm:$0xf]
        %v452 = vld [vmem:[#allocation8 + $0x30] sm:$0xf]
        %v453 = vld [vmem:[#allocation8 + $0x34] sm:$0xf]
        %v454 = vld [vmem:[#allocation8 + $0x38] sm:$0xf]
        %v455 = vld [vmem:[#allocation8 + $0x3c] sm:$0xf]
        %v456 = vld [vmem:[#allocation8 + $0x40] sm:$0xf]
        %v457 = vld [vmem:[#allocation8 + $0x44] sm:$0xf]
        %v458 = vld [vmem:[#allocation8 + $0x48] sm:$0xf]
        %v459 = vld [vmem:[#allocation8 + $0x4c] sm:$0xf]
        %v460 = vld [vmem:[#allocation8 + $0x50] sm:$0xf]
        %v461 = vld [vmem:[#allocation8 + $0x54] sm:$0xf]
        %v462 = vld [vmem:[#allocation8 + $0x58] sm:$0xf]
        %v463 = vld [vmem:[#allocation8 + $0x5c] sm:$0xf]
        %v464 = vld [vmem:[#allocation8 + $0x60] sm:$0xf]
        %v465 = vld [vmem:[#allocation8 + $0x64] sm:$0xf]
        %v466 = vld [vmem:[#allocation8 + $0x68] sm:$0xf]
        %v467 = vld [vmem:[#allocation8 + $0x6c] sm:$0xf]
        %v468 = vld [vmem:[#allocation8 + $0x70] sm:$0xf]
        %v469 = vld [vmem:[#allocation8 + $0x74] sm:$0xf]
        %v470 = vld [vmem:[#allocation8 + $0x78] sm:$0xf]
        %v471 = vld [vmem:[#allocation8 + $0x7c] sm:$0xf]
        %v472 = vld [vmem:[%s4] sm:$0x1]
        %v474 = vperm.slane %v472, 0
        %v508 = vunpack.c.l.b16 %v440
        %v509 = vunpack.c.l.b16 %v441
        %v510 = vunpack.c.l.b16 %v442
        %v511 = vunpack.c.l.b16 %v443
        %v512 = vunpack.c.l.b16 %v444
        %v513 = vunpack.c.l.b16 %v445
        %v514 = vunpack.c.l.b16 %v446
        %v515 = vunpack.c.l.b16 %v447
        %v516 = vunpack.c.l.b16 %v448
        %v517 = vunpack.c.l.b16 %v449
        %v518 = vunpack.c.l.b16 %v450
        %v519 = vunpack.c.l.b16 %v451
        %v520 = vunpack.c.l.b16 %v452
        %v521 = vunpack.c.l.b16 %v453
        %v522 = vunpack.c.l.b16 %v454
        %v523 = vunpack.c.l.b16 %v455
        %v524 = vunpack.c.l.b16 %v456
        %v525 = vunpack.c.l.b16 %v457
        %v526 = vunpack.c.l.b16 %v458
        %v527 = vunpack.c.l.b16 %v459
        %v528 = vunpack.c.l.b16 %v460
        %v529 = vunpack.c.l.b16 %v461
        %v530 = vunpack.c.l.b16 %v462
        %v531 = vunpack.c.l.b16 %v463
        %v532 = vunpack.c.l.b16 %v464
        %v533 = vunpack.c.l.b16 %v465
        %v534 = vunpack.c.l.b16 %v466
        %v535 = vunpack.c.l.b16 %v467
        %v536 = vunpack.c.l.b16 %v468
        %v537 = vunpack.c.l.b16 %v469
        %v538 = vunpack.c.l.b16 %v470
        %v539 = vunpack.c.l.b16 %v471
        %v540 = vpack.c.b16 %v509, %v508
        %v541 = vpack.c.b16 %v511, %v510
        %v542 = vpack.c.b16 %v513, %v512
        %v543 = vpack.c.b16 %v515, %v514
        %v544 = vpack.c.b16 %v517, %v516
        %v545 = vpack.c.b16 %v519, %v518
        %v546 = vpack.c.b16 %v521, %v520
        %v547 = vpack.c.b16 %v523, %v522
        %v548 = vpack.c.b16 %v525, %v524
        %v549 = vpack.c.b16 %v527, %v526
        %v550 = vpack.c.b16 %v529, %v528
        %v551 = vpack.c.b16 %v531, %v530
        %v552 = vpack.c.b16 %v533, %v532
        %v553 = vpack.c.b16 %v535, %v534
        %v554 = vpack.c.b16 %v537, %v536
        %v555 = vpack.c.b16 %v539, %v538
        %572 = vmatpush.bf16.msra.mxu0 %v547
        %573 = vmatpush.bf16.msra.mxu0 %v546
        %574 = vmatpush.bf16.msra.mxu0 %v545
        %575 = vmatpush.bf16.msra.mxu0 %v544
        %576 = vmatpush.bf16.msra.mxu0 %v543
        %577 = vmatpush.bf16.msra.mxu0 %v542
        %578 = vmatpush.bf16.msra.mxu0 %v541
        %579 = vmatpush.bf16.msra.mxu0 %v540
        %580 = vmatmul.bf16.gmra.mxu0 %v438
        %v581 = vpop.f32.mrf.mxu0
        %v582 = vadd.f32 %v474, %v581
        %v583 = vpop.f32.mrf.mxu0
        %584 = vdwg.mxu0
        %585 = vmatpush.bf16.msra.mxu0 %v555
        %586 = vmatpush.bf16.msra.mxu0 %v554
        %587 = vmatpush.bf16.msra.mxu0 %v553
        %588 = vmatpush.bf16.msra.mxu0 %v552
        %589 = vmatpush.bf16.msra.mxu0 %v551
        %590 = vmatpush.bf16.msra.mxu0 %v550
        %591 = vmatpush.bf16.msra.mxu0 %v549
        %592 = vmatpush.bf16.msra.mxu0 %v548
        %593 = vmatmul.bf16.gmra.mxu0 %v439
        %v594 = vpop.f32.mrf.mxu0
        %v595 = vadd.f32 %v582, %v594
        %v596 = vpop.f32.mrf.mxu0
        %597 = vdwg.mxu0
        %598 = vst [vmem:[%s289] sm:$0xff] %v595
        %s599 = sand.u32 %s142, 1
        %s600 = scalar_lea.sflag [#allocation4], %s599
        %s601 = sand.u32 %s142, 1
        %s602 = smul.addr %s601, 8
        %s603 = scalar_lea.vmem [#allocation10], %s602
        // Predicated region
        $region57: #{tpu_custom_call.1} parent=39 // pred_check
          %p604 = pneg %p152
        $region58: #{tpu_custom_call.1} parent=39 // pred_check_branch
          %606 = sbr.rel (%p604) target = $region60
        $region59: #{tpu_custom_call.1} parent=39 // pred_region
          %608 = vsyncadd %s600, 0
          %s609 = smul.addr %s24, 8
          %s610 = scalar_lea.hbm %s5, %s609
          %s612 = sshll.u32 %s603, 4
          %s613 = int_to_ptr.vmem [resolvable:$true] %s612
          %s614 = sshll.u32 %s610, 4
          %s615 = int_to_ptr.hbm [resolvable:$true] %s614
          %617 = dma.vmem_to_hbm [thread:$0]  %s613, 128, %s615, %s600
        $region60: #{tpu_custom_call.1} parent=39 // pred_fallthru
          _
      $region40: #{tpu_custom_call.1} parent=5 // pred_fallthru
        _
      %p618 = scmp.le.s32.totalorder 2, %s19
      // Predicated region
      $region61: #{tpu_custom_call.1} parent=5 // pred_check
        %p619 = pneg %p618
      $region62: #{tpu_custom_call.1} parent=5 // pred_check_branch
        %621 = sbr.rel (%p619) target = $region64
      $region63: #{tpu_custom_call.1} parent=5 // pred_region
        %s622 = ssub.s32 %s19, 2
        // Predicated region
        $region65: #{tpu_custom_call.1} parent=63 // pred_check
          %p623 = pneg %p158
        $region66: #{tpu_custom_call.1} parent=63 // pred_check_branch
          %625 = sbr.rel (%p623) target = $region68
        $region67: #{tpu_custom_call.1} parent=63 // pred_region
          %s626 = sand.u32 %s143, 1
          %s627 = scalar_lea.sflag [#allocation4], %s626
          %s628 = sand.u32 %s143, 1
          %s629 = smul.addr %s628, 8
          %s630 = scalar_lea.vmem [#allocation10], %s629
          %632 = dma.done %s627, 128
        $region68: #{tpu_custom_call.1} parent=63 // pred_fallthru
          _
      $region64: #{tpu_custom_call.1} parent=5 // pred_fallthru
        _
    $region6: #{tpu_custom_call.1} parent=1 // loop_footer
      %s23 = sadd.s32 1, %s19
    $region7: #{tpu_custom_call.1} parent=1 // loop_footer_branch
      %18 = sbr.rel target = $region3
    $region8: #{tpu_custom_call.1} parent=1 // loop_exit
      _
    %633 = vsyncpa [#allocation3], 1
    %s634 = scalar_lea.sflag [#allocation3], 1
    %635 = vsyncpa %s634, 1
    %636 = vsyncpa [#allocation6], 1
    %637 = vsyncpa [#allocation9], 1
    %638 = vsyncpa [#allocation4], 1
    %s639 = scalar_lea.sflag [#allocation4], 1
    %640 = vsyncpa %s639, 1

// kernel: tpu_custom_call.1
$region0: #{tpu_custom_call.1}
  #allocation0 [shape = 'u32[]', space=smem, size = 0x4, offset = 0x4, fixed_abs, tag = 'smem constant byte address 0x4 - core index']
  #allocation1 [shape = 'u32[72,128]{1,0:T(1,128)}', space=vmem, size = 0x9000, scoped, tag = 'internal scratch']
  %s0 = inlined_call_operand.hbm [shape: f32[16,128], index: 0, kind: input, shape index: {}]
  %s1 = inlined_call_operand.hbm [shape: bf16[128,256], index: 1, kind: input, shape index: {}]
  %s2 = inlined_call_operand.hbm [shape: f32[1,256], index: 2, kind: input, shape index: {}]
  %s3 = inlined_call_operand.hbm [shape: bf16[256,128], index: 3, kind: input, shape index: {}]
  %s4 = inlined_call_operand.vmem [shape: f32[1,128], index: 4, kind: input, shape index: {}]
  %s5 = inlined_call_operand.hbm [shape: f32[16,128], index: 5, kind: output, shape index: {}]
  %s6 = sld [smem:[#allocation0]]
  $region69: #{tpu_custom_call.1} parent=0
    _
  %s8 = ssub.s32 1, %s6
  %s9 = scalar_select 0, %s8, %s6
  $region1: #{tpu_custom_call.1} parent=0
    #allocation2 [shape = 'u8[8192]{0}', space=vmem, size = 0x2000, scoped, tag = 'input window, operand 0']
    #allocation3 [shape = 's32[2]{0}', space=sflag, size = 0x8, scoped, tag = 'scoped memory for tpu_custom_call.1']
    #allocation4 [shape = 's32[2]{0}', space=sflag, size = 0x8, scoped, tag = 'scoped memory for tpu_custom_call.1']
    #allocation5 [shape = 'u8[65536]{0}', space=vmem, size = 0x10000, scoped, tag = 'input window, operand 1, single buffered']
    #allocation6 [shape = 's32[1]{0}', space=sflag, size = 0x4, scoped, tag = 'scoped memory for tpu_custom_call.1']
    #allocation7 [shape = 'u8[1024]{0}', space=vmem, size = 0x400, scoped, tag = 'input window, operand 2, single buffered']
    #allocation8 [shape = 'u8[65536]{0}', space=vmem, size = 0x10000, scoped, tag = 'input window, operand 3, single buffered']
    #allocation9 [shape = 's32[1]{0}', space=sflag, size = 0x4, scoped, tag = 'scoped memory for tpu_custom_call.1']
    #allocation10 [shape = 'u8[8192]{0}', space=vmem, size = 0x2000, scoped, tag = 'output window, operand 0']
    %10 = vsyncpa [#allocation3], 0
    %s11 = scalar_lea.sflag [#allocation3], 1
    %12 = vsyncpa %s11, 0
    %13 = vsyncpa [#allocation6], 0
    %14 = vsyncpa [#allocation9], 0
    %15 = vsyncpa [#allocation4], 0
    %s16 = scalar_lea.sflag [#allocation4], 1
    %17 = vsyncpa %s16, 0
    loop: start=0, step=1, limit=4
    $region2: #{tpu_custom_call.1} parent=1 // loop_pre_header
      _
    $region3: #{tpu_custom_call.1} parent=1 // loop_header
      %s19 = sphi 0, %s23
      %p20 = scmp.ge.s32.totalorder %s19, 4
      %s29 = sphi 0, %s31
      %s32 = sphi 0, %s29
      %s33 = sphi 0, %s32
      %s49 = sphi 0, %s33
      %s53 = sphi 0, %s53
      %s55 = sphi 0, %s53
      %s56 = sphi 0, %s55
      %s70 = sphi 0, %s56
      %s74 = sphi 0, %s74
      %s76 = sphi 0, %s74
      %s77 = sphi 0, %s76
      %s91 = sphi 0, %s77
      %s95 = sphi 0, %s95
      %s97 = sphi 0, %s95
      %s98 = sphi 0, %s97
      %s112 = sphi 0, %s98
      %s116 = sphi 0, %s116
      %s118 = sphi 0, %s116
      %s119 = sphi 0, %s118
      %s133 = sphi 0, %s119
      %s139 = sphi 0, %s141
      %s142 = sphi 0, %s139
      %s143 = sphi 0, %s142
      %s159 = sphi 0, %s143
    $region4: #{tpu_custom_call.1} parent=1 // loop_header_branch
      %22 = sbr.rel (%p20) target = $region8
    $region5: #{tpu_custom_call.1} parent=1 // loop_body
      %s24 = ssub.s32 %s19, 1
      %s25 = ssub.s32 %s19, 2
      %s26 = sadd.s32 %s19, 1
      %s27 = ssub.s32 %s19, %s26
      %p28 = scmp.eq.s32.totalorder %s27, 0
      %s30 = sadd.s32 %s29, 1
      %s31 = scalar_select %p28, %s29, %s30
      %p34 = pneg %p28
      %p35 = scmp.eq.s32.totalorder %s19, 1
      %p36 = por %p34, %p35
      %p37 = scmp.ne.s32.totalorder %s29, %s32
      %p38 = scmp.eq.s32.totalorder %s19, 0
      %p39 = por %p37, %p38
      %p40 = scmp.ne.s32.totalorder %s29, %s32
      %p41 = scmp.eq.s32.totalorder %s24, 1
      %p42 = por %p40, %p41
      %p43 = scmp.ne.s32.totalorder %s32, %s33
      %p44 = scmp.eq.s32.totalorder %s24, 0
      %p45 = por %p43, %p44
      %p46 = scmp.ne.s32.totalorder %s32, %s33
      %p47 = scmp.eq.s32.totalorder %s25, 1
      %p48 = por %p46, %p47
      %p50 = scmp.ne.s32.totalorder %s33, %s49
      %p51 = scmp.eq.s32.totalorder %s25, 0
      %p52 = por %p50, %p51
      %s54 = sadd.s32 %s53, 1
      %p57 = scmp.eq.s32.totalorder %s19, 1
      %p58 = scmp.ne.s32.totalorder %s53, %s55
      %p59 = scmp.eq.s32.totalorder %s19, 0
      %p60 = por %p58, %p59
      %p61 = scmp.ne.s32.totalorder %s53, %s55
      %p62 = scmp.eq.s32.totalorder %s24, 1
      %p63 = por %p61, %p62
      %p64 = scmp.ne.s32.totalorder %s55, %s56
      %p65 = scmp.eq.s32.totalorder %s24, 0
      %p66 = por %p64, %p65
      %p67 = scmp.ne.s32.totalorder %s55, %s56
      %p68 = scmp.eq.s32.totalorder %s25, 1
      %p69 = por %p67, %p68
      %p71 = scmp.ne.s32.totalorder %s56, %s70
      %p72 = scmp.eq.s32.totalorder %s25, 0
      %p73 = por %p71, %p72
      %s75 = sadd.s32 %s74, 1
      %p78 = scmp.eq.s32.totalorder %s19, 1
      %p79 = scmp.ne.s32.totalorder %s74, %s76
      %p80 = scmp.eq.s32.totalorder %s19, 0
      %p81 = por %p79, %p80
      %p82 = scmp.ne.s32.totalorder %s74, %s76
      %p83 = scmp.eq.s32.totalorder %s24, 1
      %p84 = por %p82, %p83
      %p85 = scmp.ne.s32.totalorder %s76, %s77
      %p86 = scmp.eq.s32.totalorder %s24, 0
      %p87 = por %p85, %p86
      %p88 = scmp.ne.s32.totalorder %s76, %s77
      %p89 = scmp.eq.s32.totalorder %s25, 1
      %p90 = por %p88, %p89
      %p92 = scmp.ne.s32.totalorder %s77, %s91
      %p93 = scmp.eq.s32.totalorder %s25, 0
      %p94 = por %p92, %p93
      %s96 = sadd.s32 %s95, 1
      %p99 = scmp.eq.s32.totalorder %s19, 1
      %p100 = scmp.ne.s32.totalorder %s95, %s97
      %p101 = scmp.eq.s32.totalorder %s19, 0
      %p102 = por %p100, %p101
      %p103 = scmp.ne.s32.totalorder %s95, %s97
      %p104 = scmp.eq.s32.totalorder %s24, 1
      %p105 = por %p103, %p104
      %p106 = scmp.ne.s32.totalorder %s97, %s98
      %p107 = scmp.eq.s32.totalorder %s24, 0
      %p108 = por %p106, %p107
      %p109 = scmp.ne.s32.totalorder %s97, %s98
      %p110 = scmp.eq.s32.totalorder %s25, 1
      %p111 = por %p109, %p110
      %p113 = scmp.ne.s32.totalorder %s98, %s112
      %p114 = scmp.eq.s32.totalorder %s25, 0
      %p115 = por %p113, %p114
      %s117 = sadd.s32 %s116, 1
      %p120 = scmp.eq.s32.totalorder %s19, 1
      %p121 = scmp.ne.s32.totalorder %s116, %s118
      %p122 = scmp.eq.s32.totalorder %s19, 0
      %p123 = por %p121, %p122
      %p124 = scmp.ne.s32.totalorder %s116, %s118
      %p125 = scmp.eq.s32.totalorder %s24, 1
      %p126 = por %p124, %p125
      %p127 = scmp.ne.s32.totalorder %s118, %s119
      %p128 = scmp.eq.s32.totalorder %s24, 0
      %p129 = por %p127, %p128
      %p130 = scmp.ne.s32.totalorder %s118, %s119
      %p131 = scmp.eq.s32.totalorder %s25, 1
      %p132 = por %p130, %p131
      %p134 = scmp.ne.s32.totalorder %s119, %s133
      %p135 = scmp.eq.s32.totalorder %s25, 0
      %p136 = por %p134, %p135
      %s137 = ssub.s32 %s19, %s26
      %p138 = scmp.eq.s32.totalorder %s137, 0
      %s140 = sadd.s32 %s139, 1
      %s141 = scalar_select %p138, %s139, %s140
      %p144 = pneg %p138
      %p145 = scmp.eq.s32.totalorder %s19, 1
      %p146 = por %p144, %p145
      %p147 = scmp.ne.s32.totalorder %s139, %s142
      %p148 = scmp.eq.s32.totalorder %s19, 0
      %p149 = por %p147, %p148
      %p150 = scmp.ne.s32.totalorder %s139, %s142
      %p151 = scmp.eq.s32.totalorder %s24, 1
      %p152 = por %p150, %p151
      %p153 = scmp.ne.s32.totalorder %s142, %s143
      %p154 = scmp.eq.s32.totalorder %s24, 0
      %p155 = por %p153, %p154
      %p156 = scmp.ne.s32.totalorder %s142, %s143
      %p157 = scmp.eq.s32.totalorder %s25, 1
      %p158 = por %p156, %p157
      %p160 = scmp.ne.s32.totalorder %s143, %s159
      %p161 = scmp.eq.s32.totalorder %s25, 0
      %p162 = por %p160, %p161
      %p163 = scmp.le.s32.totalorder 1, %s19
      %p164 = scmp.lt.s32.totalorder %s19, 3
      %p165 = pnand %p163, %p164
      %p166 = pneg %p165
      // Predicated region
      $region9: #{tpu_custom_call.1} parent=5 // pred_check
        _
      $region10: #{tpu_custom_call.1} parent=5 // pred_check_branch
        %168 = sbr.rel (%p165) target = $region12
      $region11: #{tpu_custom_call.1} parent=5 // pred_region
        %s169 = ssub.s32 %s19, 1
        // Predicated region
        $region13: #{tpu_custom_call.1} parent=11 // pred_check
          %p170 = pneg %p66
        $region14: #{tpu_custom_call.1} parent=11 // pred_check_branch
          %172 = sbr.rel (%p170) target = $region16
        $region15: #{tpu_custom_call.1} parent=11 // pred_region
          %174 = vsyncadd [#allocation6], 0
          %s175 = sshll.u32 %s1, 4
          %s176 = int_to_ptr.hbm [resolvable:$true] %s175
          %s177 = sshll.u32 [#allocation5], 4
          %s178 = int_to_ptr.vmem [resolvable:$true] %s177
          %183 = dma.hbm_to_vmem [thread:$0]  %s176, 2048, %s178, [#allocation6], 128, 128, 8
        $region16: #{tpu_custom_call.1} parent=11 // pred_fallthru
          _
        // Predicated region
        $region17: #{tpu_custom_call.1} parent=11 // pred_check
          %p184 = pneg %p87
        $region18: #{tpu_custom_call.1} parent=11 // pred_check_branch
          %186 = sbr.rel (%p184) target = $region20
        $region19: #{tpu_custom_call.1} parent=11 // pred_region
          %188 = vsyncadd [#allocation6], 0
          %s190 = sshll.u32 %s2, 4
          %s191 = int_to_ptr.hbm [resolvable:$true] %s190
          %s192 = sshll.u32 [#allocation7], 4
          %s193 = int_to_ptr.vmem [resolvable:$true] %s192
          %195 = dma.hbm_to_vmem [thread:$0]  %s191, 32, %s193, [#allocation6]
        $region20: #{tpu_custom_call.1} parent=11 // pred_fallthru
          _
        // Predicated region
        $region21: #{tpu_custom_call.1} parent=11 // pred_check
          %p196 = pneg %p108
        $region22: #{tpu_custom_call.1} parent=11 // pred_check_branch
          %198 = sbr.rel (%p196) target = $region24
        $region23: #{tpu_custom_call.1} parent=11 // pred_region
          %200 = vsyncadd [#allocation9], 0
          %s201 = sshll.u32 %s3, 4
          %s202 = int_to_ptr.hbm [resolvable:$true] %s201
          %s203 = sshll.u32 [#allocation8], 4
          %s204 = int_to_ptr.vmem [resolvable:$true] %s203
          %209 = dma.hbm_to_vmem [thread:$0]  %s202, 2048, %s204, [#allocation9], 64, 64, 4
        $region24: #{tpu_custom_call.1} parent=11 // pred_fallthru
          _
        // Predicated region
        $region25: #{tpu_custom_call.1} parent=11 // pred_check
          %p210 = pneg %p129
        $region26: #{tpu_custom_call.1} parent=11 // pred_check_branch
          %212 = sbr.rel (%p210) target = $region28
        $region27: #{tpu_custom_call.1} parent=11 // pred_region
          _
        $region28: #{tpu_custom_call.1} parent=11 // pred_fallthru
          _
      $region12: #{tpu_custom_call.1} parent=5 // pred_fallthru
        _
      %p213 = scmp.lt.s32.totalorder %s19, 2
      // Predicated region
      $region29: #{tpu_custom_call.1} parent=5 // pred_check
        %p214 = pneg %p213
      $region30: #{tpu_custom_call.1} parent=5 // pred_check_branch
        %216 = sbr.rel (%p214) target = $region32
      $region31: #{tpu_custom_call.1} parent=5 // pred_region
        // Predicated region
        $region33: #{tpu_custom_call.1} parent=31 // pred_check
          %p217 = pneg %p39
        $region34: #{tpu_custom_call.1} parent=31 // pred_check_branch
          %219 = sbr.rel (%p217) target = $region36
        $region35: #{tpu_custom_call.1} parent=31 // pred_region
          %s220 = sand.u32 %s29, 1
          %s221 = scalar_lea.sflag [#allocation3], %s220
          %s222 = sand.u32 %s29, 1
          %s223 = smul.addr %s222, 8
          %s224 = scalar_lea.vmem [#allocation2], %s223
          %226 = vsyncadd %s221, 0
          %s227 = smul.addr %s19, 8
          %s228 = scalar_lea.hbm %s0, %s227
          %s230 = sshll.u32 %s228, 4
          %s231 = int_to_ptr.hbm [resolvable:$true] %s230
          %s232 = sshll.u32 %s224, 4
          %s233 = int_to_ptr.vmem [resolvable:$true] %s232
          %235 = dma.hbm_to_vmem [thread:$0]  %s231, 128, %s233, %s221
        $region36: #{tpu_custom_call.1} parent=31 // pred_fallthru
          _
      $region32: #{tpu_custom_call.1} parent=5 // pred_fallthru
        _
      %p236 = scmp.le.s32.totalorder 1, %s19
      %p237 = scmp.lt.s32.totalorder %s19, 3
      %p238 = pnand %p236, %p237
      %p239 = pneg %p238
      // Predicated region
      $region37: #{tpu_custom_call.1} parent=5 // pred_check
        _
      $region38: #{tpu_custom_call.1} parent=5 // pred_check_branch
        %241 = sbr.rel (%p238) target = $region40
      $region39: #{tpu_custom_call.1} parent=5 // pred_region
        %s242 = ssub.s32 %s19, 1
        %s243 = sand.u32 %s32, 1
        %s244 = scalar_lea.sflag [#allocation3], %s243
        %s245 = sand.u32 %s32, 1
        %s246 = smul.addr %s245, 8
        %s247 = scalar_lea.vmem [#allocation2], %s246
        // Predicated region
        $region41: #{tpu_custom_call.1} parent=39 // pred_check
          %p248 = pneg %p45
        $region42: #{tpu_custom_call.1} parent=39 // pred_check_branch
          %250 = sbr.rel (%p248) target = $region44
        $region43: #{tpu_custom_call.1} parent=39 // pred_region
          %252 = dma.done %s244, 128
        $region44: #{tpu_custom_call.1} parent=39 // pred_fallthru
          _
        // Predicated region
        $region45: #{tpu_custom_call.1} parent=39 // pred_check
          %p253 = pneg %p66
        $region46: #{tpu_custom_call.1} parent=39 // pred_check_branch
          %255 = sbr.rel (%p253) target = $region48
        $region47: #{tpu_custom_call.1} parent=39 // pred_region
          %257 = dma.done [#allocation6], 2048
        $region48: #{tpu_custom_call.1} parent=39 // pred_fallthru
          _
        // Predicated region
        $region49: #{tpu_custom_call.1} parent=39 // pred_check
          %p258 = pneg %p87
        $region50: #{tpu_custom_call.1} parent=39 // pred_check_branch
          %260 = sbr.rel (%p258) target = $region52
        $region51: #{tpu_custom_call.1} parent=39 // pred_region
          %262 = dma.done [#allocation6], 32
        $region52: #{tpu_custom_call.1} parent=39 // pred_fallthru
          _
        // Predicated region
        $region53: #{tpu_custom_call.1} parent=39 // pred_check
          %p263 = pneg %p108
        $region54: #{tpu_custom_call.1} parent=39 // pred_check_branch
          %265 = sbr.rel (%p263) target = $region56
        $region55: #{tpu_custom_call.1} parent=39 // pred_region
          %267 = dma.done [#allocation9], 2048
        $region56: #{tpu_custom_call.1} parent=39 // pred_fallthru
          _
        %s268 = sand.u32 %s32, 1
        %s269 = scalar_lea.sflag [#allocation3], %s268
        %s270 = sand.u32 %s32, 1
        %s271 = smul.addr %s270, 8
        %s272 = scalar_lea.vmem [#allocation2], %s271
        %p273 = pneg %p45
        %p274 = pneg %p42
        %p275 = pneg %p66
        %p276 = pneg %p63
        %p277 = pneg %p87
        %p278 = pneg %p84
        %p279 = pneg %p108
        %p280 = pneg %p105
        %p281 = pneg %p129
        %p282 = pneg %p126
        %p283 = pneg %p155
        %p284 = pneg %p152
        %s285 = sand.u32 %s142, 1
        %s286 = scalar_lea.sflag [#allocation4], %s285
        %s287 = sand.u32 %s142, 1
        %s288 = smul.addr %s287, 8
        %s289 = scalar_lea.vmem [#allocation10], %s288
        %v290 = vld [vmem:[%s247] sm:$0xff]
        %v291 = vpack.c.bf16 %v290, %v290
        %v292 = vld [vmem:[#allocation5] sm:$0xff]
        %v293 = vld [vmem:[#allocation5 + $0x8] sm:$0xff]
        %v294 = vld [vmem:[#allocation5 + $0x10] sm:$0xff]
        %v295 = vld [vmem:[#allocation5 + $0x18] sm:$0xff]
        %v296 = vld [vmem:[#allocation5 + $0x20] sm:$0xff]
        %v297 = vld [vmem:[#allocation5 + $0x28] sm:$0xff]
        %v298 = vld [vmem:[#allocation5 + $0x30] sm:$0xff]
        %v299 = vld [vmem:[#allocation5 + $0x38] sm:$0xff]
        %v300 = vld [vmem:[#allocation5 + $0x40] sm:$0xff]
        %v301 = vld [vmem:[#allocation5 + $0x48] sm:$0xff]
        %v302 = vld [vmem:[#allocation5 + $0x50] sm:$0xff]
        %v303 = vld [vmem:[#allocation5 + $0x58] sm:$0xff]
        %v304 = vld [vmem:[#allocation5 + $0x60] sm:$0xff]
        %v305 = vld [vmem:[#allocation5 + $0x68] sm:$0xff]
        %v306 = vld [vmem:[#allocation5 + $0x70] sm:$0xff]
        %v307 = vld [vmem:[#allocation5 + $0x78] sm:$0xff]
        %v308 = vld [vmem:[#allocation7] sm:$0x3]
        %v310 = vperm.slane %v308, 0
        %v311 = vperm.slane %v308, 1
        %v330 = vunpack.c.l.b16 %v292
        %v331 = vunpack.c.h.b16 %v292
        %v332 = vunpack.c.l.b16 %v293
        %v333 = vunpack.c.h.b16 %v293
        %v334 = vunpack.c.l.b16 %v294
        %v335 = vunpack.c.h.b16 %v294
        %v336 = vunpack.c.l.b16 %v295
        %v337 = vunpack.c.h.b16 %v295
        %v338 = vunpack.c.l.b16 %v296
        %v339 = vunpack.c.h.b16 %v296
        %v340 = vunpack.c.l.b16 %v297
        %v341 = vunpack.c.h.b16 %v297
        %v342 = vunpack.c.l.b16 %v298
        %v343 = vunpack.c.h.b16 %v298
        %v344 = vunpack.c.l.b16 %v299
        %v345 = vunpack.c.h.b16 %v299
        %v346 = vunpack.c.l.b16 %v300
        %v347 = vunpack.c.h.b16 %v300
        %v348 = vunpack.c.l.b16 %v301
        %v349 = vunpack.c.h.b16 %v301
        %v350 = vunpack.c.l.b16 %v302
        %v351 = vunpack.c.h.b16 %v302
        %v352 = vunpack.c.l.b16 %v303
        %v353 = vunpack.c.h.b16 %v303
        %v354 = vunpack.c.l.b16 %v304
        %v355 = vunpack.c.h.b16 %v304
        %v356 = vunpack.c.l.b16 %v305
        %v357 = vunpack.c.h.b16 %v305
        %v358 = vunpack.c.l.b16 %v306
        %v359 = vunpack.c.h.b16 %v306
        %v360 = vunpack.c.l.b16 %v307
        %v361 = vunpack.c.h.b16 %v307
        %v362 = vpack.c.b16 %v332, %v330
        %v363 = vpack.c.b16 %v333, %v331
        %v364 = vpack.c.b16 %v336, %v334
        %v365 = vpack.c.b16 %v337, %v335
        %v366 = vpack.c.b16 %v340, %v338
        %v367 = vpack.c.b16 %v341, %v339
        %v368 = vpack.c.b16 %v344, %v342
        %v369 = vpack.c.b16 %v345, %v343
        %v370 = vpack.c.b16 %v348, %v346
        %v371 = vpack.c.b16 %v349, %v347
        %v372 = vpack.c.b16 %v352, %v350
        %v373 = vpack.c.b16 %v353, %v351
        %v374 = vpack.c.b16 %v356, %v354
        %v375 = vpack.c.b16 %v357, %v355
        %v376 = vpack.c.b16 %v360, %v358
        %v377 = vpack.c.b16 %v361, %v359
        %394 = vmatpush.bf16.msra.mxu0 %v376
        %395 = vmatpush.bf16.msra.mxu0 %v374
        %396 = vmatpush.bf16.msra.mxu0 %v372
        %397 = vmatpush.bf16.msra.mxu0 %v370
        %398 = vmatpush.bf16.msra.mxu0 %v368
        %399 = vmatpush.bf16.msra.mxu0 %v366
        %400 = vmatpush.bf16.msra.mxu0 %v364
        %401 = vmatpush.bf16.msra.mxu0 %v362
        %402 = vmatmul.bf16.gmra.mxu0 %v291
        %v403 = vpop.f32.mrf.mxu0
        %v404 = vadd.f32 %v310, %v403
        %v405 = vpop.f32.mrf.mxu0
        %406 = vdwg.mxu0
        %407 = vmatpush.bf16.msra.mxu0 %v377
        %408 = vmatpush.bf16.msra.mxu0 %v375
        %409 = vmatpush.bf16.msra.mxu0 %v373
        %410 = vmatpush.bf16.msra.mxu0 %v371
        %411 = vmatpush.bf16.msra.mxu0 %v369
        %412 = vmatpush.bf16.msra.mxu0 %v367
        %413 = vmatpush.bf16.msra.mxu0 %v365
        %414 = vmatpush.bf16.msra.mxu0 %v363
        %415 = vmatmul.bf16.gmra.mxu0 %v291
        %v416 = vpop.f32.mrf.mxu0
        %v417 = vadd.f32 %v311, %v416
        %v418 = vpop.f32.mrf.mxu0
        %419 = vdwg.mxu0
        %v420 = vmul.f32 %v404, %v404
        %v421 = vmul.f32 %v417, %v417
        %v422 = vmul.f32 %v404, %v420
        %v423 = vmul.f32 %v417, %v421
        %v424 = vmul.f32 %v422, 0.044715
        %v425 = vmul.f32 %v423, 0.044715
        %v426 = vadd.f32 %v404, %v424
        %v427 = vadd.f32 %v417, %v425
        %v428 = vmul.f32 %v426, 0.7978846
        %v429 = vmul.f32 %v427, 0.7978846
        %v430 = vtanh.pop %v428
        %v431 = vtanh.pop %v429
        %v432 = vadd.f32 %v430, 1.0
        %v433 = vadd.f32 %v431, 1.0
        %v434 = vmul.f32 %v432, 0.5
        %v435 = vmul.f32 %v433, 0.5
        %v436 = vmul.f32 %v404, %v434
        %v437 = vmul.f32 %v417, %v435
        %v438 = vpack.c.bf16 %v436, %v436
        %v439 = vpack.c.bf16 %v437, %v437
        %v440 = vld [vmem:[#allocation8] sm:$0xf]
        %v441 = vld [vmem:[#allocation8 + $0x4] sm:$0xf]
        %v442 = vld [vmem:[#allocation8 + $0x8] sm:$0xf]
        %v443 = vld [vmem:[#allocation8 + $0xc] sm:$0xf]
        %v444 = vld [vmem:[#allocation8 + $0x10] sm:$0xf]
        %v445 = vld [vmem:[#allocation8 + $0x14] sm:$0xf]
        %v446 = vld [vmem:[#allocation8 + $0x18] sm:$0xf]
        %v447 = vld [vmem:[#allocation8 + $0x1c] sm:$0xf]
        %v448 = vld [vmem:[#allocation8 + $0x20] sm:$0xf]
        %v449 = vld [vmem:[#allocation8 + $0x24] sm:$0xf]
        %v450 = vld [vmem:[#allocation8 + $0x28] sm:$0xf]
        %v451 = vld [vmem:[#allocation8 + $0x2c] sm:$0xf]
        %v452 = vld [vmem:[#allocation8 + $0x30] sm:$0xf]
        %v453 = vld [vmem:[#allocation8 + $0x34] sm:$0xf]
        %v454 = vld [vmem:[#allocation8 + $0x38] sm:$0xf]
        %v455 = vld [vmem:[#allocation8 + $0x3c] sm:$0xf]
        %v456 = vld [vmem:[#allocation8 + $0x40] sm:$0xf]
        %v457 = vld [vmem:[#allocation8 + $0x44] sm:$0xf]
        %v458 = vld [vmem:[#allocation8 + $0x48] sm:$0xf]
        %v459 = vld [vmem:[#allocation8 + $0x4c] sm:$0xf]
        %v460 = vld [vmem:[#allocation8 + $0x50] sm:$0xf]
        %v461 = vld [vmem:[#allocation8 + $0x54] sm:$0xf]
        %v462 = vld [vmem:[#allocation8 + $0x58] sm:$0xf]
        %v463 = vld [vmem:[#allocation8 + $0x5c] sm:$0xf]
        %v464 = vld [vmem:[#allocation8 + $0x60] sm:$0xf]
        %v465 = vld [vmem:[#allocation8 + $0x64] sm:$0xf]
        %v466 = vld [vmem:[#allocation8 + $0x68] sm:$0xf]
        %v467 = vld [vmem:[#allocation8 + $0x6c] sm:$0xf]
        %v468 = vld [vmem:[#allocation8 + $0x70] sm:$0xf]
        %v469 = vld [vmem:[#allocation8 + $0x74] sm:$0xf]
        %v470 = vld [vmem:[#allocation8 + $0x78] sm:$0xf]
        %v471 = vld [vmem:[#allocation8 + $0x7c] sm:$0xf]
        %v472 = vld [vmem:[%s4] sm:$0x1]
        %v474 = vperm.slane %v472, 0
        %v508 = vunpack.c.l.b16 %v440
        %v509 = vunpack.c.l.b16 %v441
        %v510 = vunpack.c.l.b16 %v442
        %v511 = vunpack.c.l.b16 %v443
        %v512 = vunpack.c.l.b16 %v444
        %v513 = vunpack.c.l.b16 %v445
        %v514 = vunpack.c.l.b16 %v446
        %v515 = vunpack.c.l.b16 %v447
        %v516 = vunpack.c.l.b16 %v448
        %v517 = vunpack.c.l.b16 %v449
        %v518 = vunpack.c.l.b16 %v450
        %v519 = vunpack.c.l.b16 %v451
        %v520 = vunpack.c.l.b16 %v452
        %v521 = vunpack.c.l.b16 %v453
        %v522 = vunpack.c.l.b16 %v454
        %v523 = vunpack.c.l.b16 %v455
        %v524 = vunpack.c.l.b16 %v456
        %v525 = vunpack.c.l.b16 %v457
        %v526 = vunpack.c.l.b16 %v458
        %v527 = vunpack.c.l.b16 %v459
        %v528 = vunpack.c.l.b16 %v460
        %v529 = vunpack.c.l.b16 %v461
        %v530 = vunpack.c.l.b16 %v462
        %v531 = vunpack.c.l.b16 %v463
        %v532 = vunpack.c.l.b16 %v464
        %v533 = vunpack.c.l.b16 %v465
        %v534 = vunpack.c.l.b16 %v466
        %v535 = vunpack.c.l.b16 %v467
        %v536 = vunpack.c.l.b16 %v468
        %v537 = vunpack.c.l.b16 %v469
        %v538 = vunpack.c.l.b16 %v470
        %v539 = vunpack.c.l.b16 %v471
        %v540 = vpack.c.b16 %v509, %v508
        %v541 = vpack.c.b16 %v511, %v510
        %v542 = vpack.c.b16 %v513, %v512
        %v543 = vpack.c.b16 %v515, %v514
        %v544 = vpack.c.b16 %v517, %v516
        %v545 = vpack.c.b16 %v519, %v518
        %v546 = vpack.c.b16 %v521, %v520
        %v547 = vpack.c.b16 %v523, %v522
        %v548 = vpack.c.b16 %v525, %v524
        %v549 = vpack.c.b16 %v527, %v526
        %v550 = vpack.c.b16 %v529, %v528
        %v551 = vpack.c.b16 %v531, %v530
        %v552 = vpack.c.b16 %v533, %v532
        %v553 = vpack.c.b16 %v535, %v534
        %v554 = vpack.c.b16 %v537, %v536
        %v555 = vpack.c.b16 %v539, %v538
        %572 = vmatpush.bf16.msra.mxu0 %v547
        %573 = vmatpush.bf16.msra.mxu0 %v546
        %574 = vmatpush.bf16.msra.mxu0 %v545
        %575 = vmatpush.bf16.msra.mxu0 %v544
        %576 = vmatpush.bf16.msra.mxu0 %v543
        %577 = vmatpush.bf16.msra.mxu0 %v542
        %578 = vmatpush.bf16.msra.mxu0 %v541
        %579 = vmatpush.bf16.msra.mxu0 %v540
        %580 = vmatmul.bf16.gmra.mxu0 %v438
        %v581 = vpop.f32.mrf.mxu0
        %v582 = vadd.f32 %v474, %v581
        %v583 = vpop.f32.mrf.mxu0
        %584 = vdwg.mxu0
        %585 = vmatpush.bf16.msra.mxu0 %v555
        %586 = vmatpush.bf16.msra.mxu0 %v554
        %587 = vmatpush.bf16.msra.mxu0 %v553
        %588 = vmatpush.bf16.msra.mxu0 %v552
        %589 = vmatpush.bf16.msra.mxu0 %v551
        %590 = vmatpush.bf16.msra.mxu0 %v550
        %591 = vmatpush.bf16.msra.mxu0 %v549
        %592 = vmatpush.bf16.msra.mxu0 %v548
        %593 = vmatmul.bf16.gmra.mxu0 %v439
        %v594 = vpop.f32.mrf.mxu0
        %v595 = vadd.f32 %v582, %v594
        %v596 = vpop.f32.mrf.mxu0
        %597 = vdwg.mxu0
        %598 = vst [vmem:[%s289] sm:$0xff] %v595
        %s599 = sand.u32 %s142, 1
        %s600 = scalar_lea.sflag [#allocation4], %s599
        %s601 = sand.u32 %s142, 1
        %s602 = smul.addr %s601, 8
        %s603 = scalar_lea.vmem [#allocation10], %s602
        // Predicated region
        $region57: #{tpu_custom_call.1} parent=39 // pred_check
          %p604 = pneg %p152
        $region58: #{tpu_custom_call.1} parent=39 // pred_check_branch
          %606 = sbr.rel (%p604) target = $region60
        $region59: #{tpu_custom_call.1} parent=39 // pred_region
          %608 = vsyncadd %s600, 0
          %s609 = smul.addr %s24, 8
          %s610 = scalar_lea.hbm %s5, %s609
          %s612 = sshll.u32 %s603, 4
          %s613 = int_to_ptr.vmem [resolvable:$true] %s612
          %s614 = sshll.u32 %s610, 4
          %s615 = int_to_ptr.hbm [resolvable:$true] %s614
          %617 = dma.vmem_to_hbm [thread:$0]  %s613, 128, %s615, %s600
        $region60: #{tpu_custom_call.1} parent=39 // pred_fallthru
          _
      $region40: #{tpu_custom_call.1} parent=5 // pred_fallthru
        _
      %p618 = scmp.le.s32.totalorder 2, %s19
      // Predicated region
      $region61: #{tpu_custom_call.1} parent=5 // pred_check
        %p619 = pneg %p618
      $region62: #{tpu_custom_call.1} parent=5 // pred_check_branch
        %621 = sbr.rel (%p619) target = $region64
      $region63: #{tpu_custom_call.1} parent=5 // pred_region
        %s622 = ssub.s32 %s19, 2
        // Predicated region
        $region65: #{tpu_custom_call.1} parent=63 // pred_check
          %p623 = pneg %p158
        $region66: #{tpu_custom_call.1} parent=63 // pred_check_branch
          %625 = sbr.rel (%p623) target = $region68
        $region67: #{tpu_custom_call.1} parent=63 // pred_region
          %s626 = sand.u32 %s143, 1
          %s627 = scalar_lea.sflag [#allocation4], %s626
          %s628 = sand.u32 %s143, 1
          %s629 = smul.addr %s628, 8
          %s630 = scalar_lea.vmem [#allocation10], %s629
          %632 = dma.done %s627, 128
        $region68: #{tpu_custom_call.1} parent=63 // pred_fallthru
          _
      $region64: #{tpu_custom_call.1} parent=5 // pred_fallthru
        _
    $region6: #{tpu_custom_call.1} parent=1 // loop_footer
      %s23 = sadd.s32 1, %s19
    $region7: #{tpu_custom_call.1} parent=1 // loop_footer_branch
      %18 = sbr.rel target = $region3
    $region8: #{tpu_custom_call.1} parent=1 // loop_exit
      _
    %633 = vsyncpa [#allocation3], 1
    %s634 = scalar_lea.sflag [#allocation3], 1
    %635 = vsyncpa %s634, 1
    %636 = vsyncpa [#allocation6], 1
    %637 = vsyncpa [#allocation9], 1
    %638 = vsyncpa [#allocation4], 1
    %s639 = scalar_lea.sflag [#allocation4], 1
    %640 = vsyncpa %s639, 1

</llo_original>
